<compile_context>
chip_gen: v7x
topology: tpu7x:2x2x1
jax: 0.10.0
libtpu: 0.0.40
codegen_flags: <defaults>
</compile_context>

<pallas_src>
import jax
import jax.numpy as jnp
from jax.experimental import pallas as pl
from jax.experimental.pallas import tpu as pltpu


def _round_up(n: int, m: int) -> int:
    return ((n + m - 1) // m) * m


def _cdiv(a: int, b: int) -> int:
    return -(-a // b)


def _tpu_vmem_and_cores():
    """Best-effort per-TensorCore VMEM bytes + TensorCore count."""
    vmem = 64 * 1024 * 1024   # conservative fallback: v7x per-TC VMEM
    cores = 1
    try:
        info = pltpu.get_tpu_info()
        v = int(getattr(info, "vmem_capacity_bytes", 0) or 0)
        if v > 0:
            vmem = v
        for name in ("num_cores", "core_count", "num_tensorcores",
                     "tensorcore_count", "cores_per_chip"):
            c = getattr(info, name, None)
            if isinstance(c, int) and c > 0:
                cores = c
                break
    except Exception:
        pass
    return vmem, cores


def _make_sp2_kernel(D: int, tk: int, kt: int, needs_mask: bool):
    """Kernel: accumulate one (B, tk) tile's a @ a.T into the (B, B) output."""

    def kernel(x_ref, o_ref):
        p = pl.program_id(0)   # split-K part (TensorCore on v7x)
        k = pl.program_id(1)   # reduction step within the part

        @pl.when(k == 0)
        def _():
            o_ref[...] = jnp.zeros_like(o_ref)

        a = x_ref[...]
        if needs_mask:
            # Zero out columns past the true D (ragged last tile and any
            # fully out-of-bounds tile of an uneven split).  OOB reads are
            # garbage in Pallas, so this select is required for correctness
            # and replaces the old jnp.pad HBM round-trip.
            tile_idx = p * kt + k
            col = jax.lax.broadcasted_iota(jnp.int32, a.shape, 1)
            a = jnp.where(col + tile_idx * tk < D, a, jnp.zeros_like(a))

        # a @ a.T on the MXU, accumulated in f32 directly into the
        # VMEM-resident output block (same block index for every k).
        o_ref[...] += jax.lax.dot_general(
            a, a,
            dimension_numbers=(((1,), (1,)), ((), ())),
            preferred_element_type=jnp.float32,
        )

    return kernel


def sp2_forward(fm_s: jax.Array, *, out_dtype=None, max_tk: int | None = None) -> jax.Array:
    """Compute G_s = flatten(fm_s) @ flatten(fm_s).T with a Pallas kernel.

    max_tk is a test-only override; by default the VMEM budget alone picks tk.
    If the caller can provide fm_s already in bf16, HBM traffic halves (the
    only cost that matters here); accumulation is always f32.
    """
    B = fm_s.shape[0]
    x = fm_s.reshape(B, -1)          # row-major flatten == torch .view(B, -1)
    D = x.shape[1]
    if out_dtype is None:
        out_dtype = fm_s.dtype       # matches torch.mm output dtype
    itemsize = x.dtype.itemsize

    vmem_bytes, num_cores = _tpu_vmem_and_cores()

    # ---- contraction tile selection (generation-aware VMEM budget) ---------
    # Double-buffered single input: 2 * round_up(B, sublane) * tk * itemsize.
    sublane = max(8, 32 // itemsize)           # f32->8, bf16->16, int8->32
    b_pad = _round_up(B, sublane)
    input_budget = vmem_bytes // 2             # input pair <= half of VMEM
    tk_cap = max(128, input_budget // (2 * b_pad * itemsize))
    d128 = _round_up(D, 128)
    tk = min(tk_cap, d128)
    if max_tk is not None:
        tk = min(tk, max_tk)
    tk = max(128, (tk // 128) * 128)           # lane-aligned

    # ---- split-K across TensorCores (v7x only; 1 on v5e/v6e) ---------------
    num_k_total = _cdiv(d128, tk)
    split_k = 2 if (num_cores >= 2 and num_k_total >= 2) else 1
    kt = _cdiv(num_k_total, split_k)
    dp = split_k * kt * tk
    needs_mask = dp > D                        # ragged / OOB tail present

    cost = pl.CostEstimate(
        flops=2 * B * B * dp,
        transcendentals=0,
        bytes_accessed=B * D * itemsize + split_k * B * B * 4,
    )

    if split_k > 1:
        sem0 = getattr(pltpu, "CORE_PARALLEL", "parallel")
    else:
        sem0 = "parallel"

    partials = pl.pallas_call(
        _make_sp2_kernel(D, tk, kt, needs_mask),
        out_shape=jax.ShapeDtypeStruct((split_k, B, B), jnp.float32),
        grid_spec=pltpu.PrefetchScalarGridSpec(
            num_scalar_prefetch=0,
            grid=(split_k, kt),
            in_specs=[
                # Single input: part p owns reduction blocks [p*kt, (p+1)*kt).
                pl.BlockSpec((B, tk), lambda p, k, kt=kt: (0, p * kt + k)),
            ],
            # One f32 partial Gram block per split-K part (summed outside).
            out_specs=pl.BlockSpec((None, B, B), lambda p, k: (p, 0, 0)),
        ),
        compiler_params=pltpu.CompilerParams(
            dimension_semantics=(sem0, "arbitrary"),
            vmem_limit_bytes=int(vmem_bytes * 7 // 8),
        ),
        cost_estimate=cost,
    )(x)

    g = partials[0] if split_k == 1 else jnp.sum(partials, axis=0)
    return g.astype(out_dtype)


if __name__ == "__main__":
    key = jax.random.PRNGKey(0)

    # --- small shape matching the module's expected input -------------------
    B, C, H, W = 2, 4, 16, 16
    fm_s = jax.random.normal(key, (B, C, H, W), dtype=jnp.float32)

    g = sp2_forward(fm_s)
    jax.block_until_ready(g)
    x = fm_s.reshape(B, -1)
    assert g.shape == (B, B)
    assert jnp.allclose(g, x @ x.T, atol=1e-3, rtol=1e-3), "mismatch (small)"

    # --- multi-step K with ragged tail masked in-kernel (no jnp.pad) --------
    key2 = jax.random.PRNGKey(1)
    fm2 = jax.random.normal(key2, (8, 16, 20, 20), dtype=jnp.float32)   # D = 6400
    g2 = sp2_forward(fm2, max_tk=512)        # forces 13 k-steps, ragged tail
    jax.block_until_ready(g2)
    x2 = fm2.reshape(8, -1)
    assert g2.shape == (8, 8)
    assert jnp.allclose(g2, x2 @ x2.T, atol=1e-2, rtol=2e-2), "mismatch (multi-k)"

    # --- D not a multiple of 128: single ragged tile, OOB cols masked -------
    key3 = jax.random.PRNGKey(2)
    fm3 = jax.random.normal(key3, (4, 3, 10, 10), dtype=jnp.float32)    # D = 300
    g3 = sp2_forward(fm3)
    jax.block_until_ready(g3)
    x3 = fm3.reshape(4, -1)
    assert g3.shape == (4, 4)
    assert jnp.allclose(g3, x3 @ x3.T, atol=1e-3, rtol=1e-3), "mismatch (ragged)"

    print("KERNEL_OK")
</pallas_src>

<mosaic_0001>
module attributes {stable_mosaic.version = 11 : i64} {
  func.func @kernel(%arg0: i32, %arg1: i32, %arg2: memref<2x1024xf32, #tpu.memory_space<vmem>>, %arg3: memref<1x2x2xf32, #tpu.memory_space<vmem>>) attributes {dimension_semantics = [#tpu.dimension_semantics<parallel>, #tpu.dimension_semantics<arbitrary>], iteration_bounds = array<i64: 1, 1>, scalar_prefetch = 0 : i64, scratch_operands = 0 : i64, tpu.core_type = #tpu.core_type<tc>, window_params = [{transform_indices = @transform_0, window_bounds = array<i64: 2, 1024>}, {transform_indices = @transform_1, window_bounds = array<i64: 1, 2, 2>}]} {
    %c0_i32 = arith.constant 0 : i32
    %0 = arith.cmpi eq, %arg1, %c0_i32 : i32
    %1 = arith.extui %0 : i1 to i32
    %c0_i32_0 = arith.constant 0 : i32
    %2 = arith.cmpi ne, %1, %c0_i32_0 : i32
    scf.if %2 {
      %cst_8 = arith.constant 0.000000e+00 : f32
      %11 = vector.broadcast %cst_8 : f32 to vector<2x2xf32>
      %c0_9 = arith.constant 0 : index
      %c0_10 = arith.constant 0 : index
      %c0_11 = arith.constant 0 : index
      %12 = vector.load %arg3[%c0_9, %c0_10, %c0_11] : memref<1x2x2xf32, #tpu.memory_space<vmem>>, vector<1x2x2xf32>
      %13 = vector.shape_cast %12 : vector<1x2x2xf32> to vector<2x2xf32>
      %14 = vector.shape_cast %11 : vector<2x2xf32> to vector<1x2x2xf32>
      tpu.vector_store %arg3[%c0_9, %c0_10, %c0_11], %14 {strides = array<i32>} : memref<1x2x2xf32, #tpu.memory_space<vmem>>, vector<1x2x2xf32>,
    } else {
    }
    %c0 = arith.constant 0 : index
    %c0_1 = arith.constant 0 : index
    %3 = vector.load %arg2[%c0, %c0_1] : memref<2x1024xf32, #tpu.memory_space<vmem>>, vector<2x1024xf32>
    %c0_2 = arith.constant 0 : index
    %c0_3 = arith.constant 0 : index
    %c0_4 = arith.constant 0 : index
    %4 = vector.load %arg3[%c0_2, %c0_3, %c0_4] : memref<1x2x2xf32, #tpu.memory_space<vmem>>, vector<1x2x2xf32>
    %5 = vector.shape_cast %4 : vector<1x2x2xf32> to vector<2x2xf32>
    %cst = arith.constant dense<0.000000e+00> : vector<2x2xf32>
    %6 = tpu.matmul %3, %3, %cst {dimension_numbers = #tpu.dot_dimension_numbers<[1], [1], [0], [0], [0, 0, 1, 0], [], []>} : vector<2x1024xf32>, vector<2x1024xf32>, vector<2x2xf32> -> vector<2x2xf32>
    %7 = arith.addf %5, %6 : vector<2x2xf32>
    %c0_5 = arith.constant 0 : index
    %c0_6 = arith.constant 0 : index
    %c0_7 = arith.constant 0 : index
    %8 = vector.load %arg3[%c0_5, %c0_6, %c0_7] : memref<1x2x2xf32, #tpu.memory_space<vmem>>, vector<1x2x2xf32>
    %9 = vector.shape_cast %8 : vector<1x2x2xf32> to vector<2x2xf32>
    %10 = vector.shape_cast %7 : vector<2x2xf32> to vector<1x2x2xf32>
    tpu.vector_store %arg3[%c0_5, %c0_6, %c0_7], %10 {strides = array<i32>} : memref<1x2x2xf32, #tpu.memory_space<vmem>>, vector<1x2x2xf32>,
    return
  }
  func.func @transform_0(%arg0: i32, %arg1: i32) -> (i32, i32) {
    %c1_i32 = arith.constant 1 : i32
    %0 = arith.muli %arg0, %c1_i32 : i32
    %1 = arith.addi %0, %arg1 : i32
    %c0_i32 = arith.constant 0 : i32
    %c0_i32_0 = arith.constant 0 : i32
    return %c0_i32, %1 : i32, i32
  }
  func.func @transform_1(%arg0: i32, %arg1: i32) -> (i32, i32, i32) {
    %c0_i32 = arith.constant 0 : i32
    %c0_i32_0 = arith.constant 0 : i32
    %c0_i32_1 = arith.constant 0 : i32
    return %arg0, %c0_i32, %c0_i32_0 : i32, i32, i32
  }
}

</mosaic_0001>

<llo_original>
// kernel: tpu_custom_call.1
$region0: #{tpu_custom_call.1}
  #allocation0 [shape = 'u32[]', space=smem, size = 0x4, offset = 0x4, fixed_abs, tag = 'smem constant byte address 0x4 - core index']
  #allocation1 [shape = 'u32[144,128]{1,0:T(1,128)}', space=vmem, size = 0x12000, scoped, tag = 'internal scratch']
  %s0 = inlined_call_operand.hbm [shape: f32[2,1024], index: 0, kind: input, shape index: {}]
  %s1 = inlined_call_operand.hbm [shape: f32[1,2,2], index: 1, kind: output, shape index: {}]
  %s2 = sld [smem:[#allocation0]]
  $region22: #{tpu_custom_call.1} parent=0
    _
  %s4 = ssub.s32 1, %s2
  %s5 = scalar_select 0, %s4, %s2
  $region1: #{tpu_custom_call.1} parent=0
    #allocation2 [shape = 'u8[8192]{0}', space=vmem, size = 0x2000, scoped, tag = 'input window, operand 0, single buffered']
    #allocation3 [shape = 's32[1]{0}', space=sflag, size = 0x4, scoped, tag = 'scoped memory for tpu_custom_call.1']
    #allocation4 [shape = 's32[1]{0}', space=sflag, size = 0x4, scoped, tag = 'scoped memory for tpu_custom_call.1']
    #allocation5 [shape = 'u8[1024]{0}', space=vmem, size = 0x400, scoped, tag = 'output window, operand 0, single buffered']
    %6 = vsyncpa [#allocation3], 0
    %7 = vsyncpa [#allocation4], 0
    // Predicated region
    $region2: #{tpu_custom_call.1} parent=1 // pred_check
      _
    $region3: #{tpu_custom_call.1} parent=1 // pred_check_branch
      %9 = sbr.rel (0) target = $region5
    $region4: #{tpu_custom_call.1} parent=1 // pred_region
      %s10 = sadd.s32 0, 0
      %s11 = smul.u32 8, %s10
      %s13 = ssub.s32 256, 256
      %14 = vsyncadd [#allocation3], %s13
      %s15 = smul.addr %s11, 32
      %s16 = scalar_lea.hbm %s0, %s15
      %s18 = sshll.u32 [#allocation2], 4
      %s19 = int_to_ptr.vmem [resolvable:$true] %s18
      %21 = dma.hbm_to_vmem [thread:$0]  %s16, 256, %s19, [#allocation3]
    $region5: #{tpu_custom_call.1} parent=1 // pred_fallthru
      _
    // Predicated region
    $region6: #{tpu_custom_call.1} parent=1 // pred_check
      _
    $region7: #{tpu_custom_call.1} parent=1 // pred_check_branch
      %23 = sbr.rel (0) target = $region9
    $region8: #{tpu_custom_call.1} parent=1 // pred_region
      %24 = dma.done [#allocation3], 256
    $region9: #{tpu_custom_call.1} parent=1 // pred_fallthru
      _
    %s25 = sadd.s32 0, 0
    %s26 = smul.u32 8, %s25
    %p27 = scmp.eq.s32.totalorder 0, 0
    // Predicated region
    $region10: #{tpu_custom_call.1} parent=1 // pred_check
      %p28 = pneg %p27
    $region11: #{tpu_custom_call.1} parent=1 // pred_check_branch
      %30 = sbr.rel (%p28) target = $region13
    $region12: #{tpu_custom_call.1} parent=1 // pred_region
      %vm31 = vcmask 9216
      %32 = vst.msk [vmem:[#allocation5] sm:$0x3] %vm31, 0.0
    $region13: #{tpu_custom_call.1} parent=1 // pred_fallthru
      _
    %v33 = vld [vmem:[#allocation2] sm:$0xff]
    %v34 = vld [vmem:[#allocation2 + $0x8] sm:$0xff]
    %v35 = vld [vmem:[#allocation5] sm:$0x3]
    %v38 = vcombine.high %v33, %v33
    %v40 = vunpack.c.l.s4 1983009808
    %v41 = vunpack.c.0.s8 %v40
    %v42 = vlaneseq
    %v43 = vshrl.u32 %v42, 7
    %v44 = vsub.s32 %v41, %v43
    %v45 = vrot.slane %v33, %v44
    %v47 = vunpack.c.l.s4 1983009808
    %v48 = vunpack.c.0.s8 %v47
    %v49 = vlaneseq
    %v50 = vshrl.u32 %v49, 7
    %v51 = vsub.s32 %v48, %v50
    %v52 = vrot.slane %v38, %v51
    %v53 = vcombine.high %v45, %v45
    %v54 = vcombine.high %v52, %v52
    %v55 = vcombine.high %v34, %v34
    %v57 = vunpack.c.l.s4 1983009808
    %v58 = vunpack.c.0.s8 %v57
    %v59 = vlaneseq
    %v60 = vshrl.u32 %v59, 7
    %v61 = vsub.s32 %v58, %v60
    %v62 = vrot.slane %v34, %v61
    %v64 = vunpack.c.l.s4 1983009808
    %v65 = vunpack.c.0.s8 %v64
    %v66 = vlaneseq
    %v67 = vshrl.u32 %v66, 7
    %v68 = vsub.s32 %v65, %v67
    %v69 = vrot.slane %v55, %v68
    %v70 = vcombine.high %v62, %v62
    %v71 = vcombine.high %v69, %v69
    %80 = vmatprep.subr.mxu0 %v53
    %81 = vmatpush1.xpose.msra.mxu0 %v45
    %82 = vmatprep.subr.mxu0 0.0
    %83 = vmatpush1.xpose.msra.mxu0 0.0
    %84 = vmatprep.subr.mxu0 0.0
    %85 = vmatpush1.xpose.msra.mxu0 0.0
    %86 = vmatprep.subr.mxu0 0.0
    %87 = vmatpush1.xpose.msra.mxu0 0.0
    %88 = vmatprep.subr.mxu0 0.0
    %89 = vmatpush1.xpose.msra.mxu0 0.0
    %90 = vmatprep.subr.mxu0 0.0
    %91 = vmatpush1.xpose.msra.mxu0 0.0
    %92 = vmatprep.subr.mxu0 0.0
    %93 = vmatpush1.xpose.msra.mxu0 0.0
    %94 = vmatprep.subr.mxu0 0.0
    %95 = vmatpush1.xpose.msra.mxu0 0.0
    %96 = vmatprep.subr.mxu0 0.0
    %97 = vmatpush1.xpose.msra.mxu0 0.0
    %98 = vmatprep.subr.mxu0 0.0
    %99 = vmatpush1.xpose.msra.mxu0 0.0
    %100 = vmatprep.subr.mxu0 0.0
    %101 = vmatpush1.xpose.msra.mxu0 0.0
    %102 = vmatprep.subr.mxu0 0.0
    %103 = vmatpush1.xpose.msra.mxu0 0.0
    %104 = vmatprep.subr.mxu0 0.0
    %105 = vmatpush1.xpose.msra.mxu0 0.0
    %106 = vmatprep.subr.mxu0 0.0
    %107 = vmatpush1.xpose.msra.mxu0 0.0
    %108 = vmatprep.subr.mxu0 0.0
    %109 = vmatpush1.xpose.msra.mxu0 0.0
    %110 = vmatprep.subr.mxu0 0.0
    %111 = vmatpush1.xpose.msra.mxu0 0.0
    %112 = vmatprep.subr.mxu0 0.0
    %113 = vmatpush1.xpose.msra.mxu0 0.0
    %114 = vmatprep.subr.mxu0 0.0
    %115 = vmatpush1.xpose.msra.mxu0 0.0
    %116 = vmatprep.subr.mxu0 0.0
    %117 = vmatpush1.xpose.msra.mxu0 0.0
    %118 = vmatprep.subr.mxu0 0.0
    %119 = vmatpush1.xpose.msra.mxu0 0.0
    %120 = vmatprep.subr.mxu0 0.0
    %121 = vmatpush1.xpose.msra.mxu0 0.0
    %122 = vmatprep.subr.mxu0 0.0
    %123 = vmatpush1.xpose.msra.mxu0 0.0
    %124 = vmatprep.subr.mxu0 0.0
    %125 = vmatpush1.xpose.msra.mxu0 0.0
    %126 = vmatprep.subr.mxu0 0.0
    %127 = vmatpush1.xpose.msra.mxu0 0.0
    %128 = vmatprep.subr.mxu0 0.0
    %129 = vmatpush1.xpose.msra.mxu0 0.0
    %130 = vmatprep.subr.mxu0 0.0
    %131 = vmatpush1.xpose.msra.mxu0 0.0
    %132 = vmatprep.subr.mxu0 0.0
    %133 = vmatpush1.xpose.msra.mxu0 0.0
    %134 = vmatprep.subr.mxu0 0.0
    %135 = vmatpush1.xpose.msra.mxu0 0.0
    %136 = vmatprep.subr.mxu0 0.0
    %137 = vmatpush1.xpose.msra.mxu0 0.0
    %138 = vmatprep.subr.mxu0 0.0
    %139 = vmatpush1.xpose.msra.mxu0 0.0
    %140 = vmatprep.subr.mxu0 0.0
    %141 = vmatpush1.xpose.msra.mxu0 0.0
    %142 = vmatprep.subr.mxu0 0.0
    %143 = vmatpush1.xpose.msra.mxu0 0.0
    %144 = vmatprep.mubr.f32.mxu0 %v53
    %145 = vmatmul.mubr.f32.gmra.mrb[0].mxu0 %v45
    %v146 = vpop.f32.mrb[0].mxu0
    %v147 = vadd.f32 0.0, %v146
    %v148 = vpop.f32.mrb[0].mxu0
    %149 = vdwg.mxu0
    %150 = vmatprep.subr.mxu0 %v54
    %151 = vmatpush1.xpose.msra.mxu0 %v52
    %152 = vmatprep.subr.mxu0 0.0
    %153 = vmatpush1.xpose.msra.mxu0 0.0
    %154 = vmatprep.subr.mxu0 0.0
    %155 = vmatpush1.xpose.msra.mxu0 0.0
    %156 = vmatprep.subr.mxu0 0.0
    %157 = vmatpush1.xpose.msra.mxu0 0.0
    %158 = vmatprep.subr.mxu0 0.0
    %159 = vmatpush1.xpose.msra.mxu0 0.0
    %160 = vmatprep.subr.mxu0 0.0
    %161 = vmatpush1.xpose.msra.mxu0 0.0
    %162 = vmatprep.subr.mxu0 0.0
    %163 = vmatpush1.xpose.msra.mxu0 0.0
    %164 = vmatprep.subr.mxu0 0.0
    %165 = vmatpush1.xpose.msra.mxu0 0.0
    %166 = vmatprep.subr.mxu0 0.0
    %167 = vmatpush1.xpose.msra.mxu0 0.0
    %168 = vmatprep.subr.mxu0 0.0
    %169 = vmatpush1.xpose.msra.mxu0 0.0
    %170 = vmatprep.subr.mxu0 0.0
    %171 = vmatpush1.xpose.msra.mxu0 0.0
    %172 = vmatprep.subr.mxu0 0.0
    %173 = vmatpush1.xpose.msra.mxu0 0.0
    %174 = vmatprep.subr.mxu0 0.0
    %175 = vmatpush1.xpose.msra.mxu0 0.0
    %176 = vmatprep.subr.mxu0 0.0
    %177 = vmatpush1.xpose.msra.mxu0 0.0
    %178 = vmatprep.subr.mxu0 0.0
    %179 = vmatpush1.xpose.msra.mxu0 0.0
    %180 = vmatprep.subr.mxu0 0.0
    %181 = vmatpush1.xpose.msra.mxu0 0.0
    %182 = vmatprep.subr.mxu0 0.0
    %183 = vmatpush1.xpose.msra.mxu0 0.0
    %184 = vmatprep.subr.mxu0 0.0
    %185 = vmatpush1.xpose.msra.mxu0 0.0
    %186 = vmatprep.subr.mxu0 0.0
    %187 = vmatpush1.xpose.msra.mxu0 0.0
    %188 = vmatprep.subr.mxu0 0.0
    %189 = vmatpush1.xpose.msra.mxu0 0.0
    %190 = vmatprep.subr.mxu0 0.0
    %191 = vmatpush1.xpose.msra.mxu0 0.0
    %192 = vmatprep.subr.mxu0 0.0
    %193 = vmatpush1.xpose.msra.mxu0 0.0
    %194 = vmatprep.subr.mxu0 0.0
    %195 = vmatpush1.xpose.msra.mxu0 0.0
    %196 = vmatprep.subr.mxu0 0.0
    %197 = vmatpush1.xpose.msra.mxu0 0.0
    %198 = vmatprep.subr.mxu0 0.0
    %199 = vmatpush1.xpose.msra.mxu0 0.0
    %200 = vmatprep.subr.mxu0 0.0
    %201 = vmatpush1.xpose.msra.mxu0 0.0
    %202 = vmatprep.subr.mxu0 0.0
    %203 = vmatpush1.xpose.msra.mxu0 0.0
    %204 = vmatprep.subr.mxu0 0.0
    %205 = vmatpush1.xpose.msra.mxu0 0.0
    %206 = vmatprep.subr.mxu0 0.0
    %207 = vmatpush1.xpose.msra.mxu0 0.0
    %208 = vmatprep.subr.mxu0 0.0
    %209 = vmatpush1.xpose.msra.mxu0 0.0
    %210 = vmatprep.subr.mxu0 0.0
    %211 = vmatpush1.xpose.msra.mxu0 0.0
    %212 = vmatprep.subr.mxu0 0.0
    %213 = vmatpush1.xpose.msra.mxu0 0.0
    %214 = vmatprep.mubr.f32.mxu0 %v54
    %215 = vmatmul.mubr.f32.gmra.mrb[0].mxu0 %v52
    %v216 = vpop.f32.mrb[0].mxu0
    %v217 = vadd.f32 %v147, %v216
    %v218 = vpop.f32.mrb[0].mxu0
    %219 = vdwg.mxu0
    %220 = vmatprep.subr.mxu0 %v70
    %221 = vmatpush1.xpose.msra.mxu0 %v62
    %222 = vmatprep.subr.mxu0 0.0
    %223 = vmatpush1.xpose.msra.mxu0 0.0
    %224 = vmatprep.subr.mxu0 0.0
    %225 = vmatpush1.xpose.msra.mxu0 0.0
    %226 = vmatprep.subr.mxu0 0.0
    %227 = vmatpush1.xpose.msra.mxu0 0.0
    %228 = vmatprep.subr.mxu0 0.0
    %229 = vmatpush1.xpose.msra.mxu0 0.0
    %230 = vmatprep.subr.mxu0 0.0
    %231 = vmatpush1.xpose.msra.mxu0 0.0
    %232 = vmatprep.subr.mxu0 0.0
    %233 = vmatpush1.xpose.msra.mxu0 0.0
    %234 = vmatprep.subr.mxu0 0.0
    %235 = vmatpush1.xpose.msra.mxu0 0.0
    %236 = vmatprep.subr.mxu0 0.0
    %237 = vmatpush1.xpose.msra.mxu0 0.0
    %238 = vmatprep.subr.mxu0 0.0
    %239 = vmatpush1.xpose.msra.mxu0 0.0
    %240 = vmatprep.subr.mxu0 0.0
    %241 = vmatpush1.xpose.msra.mxu0 0.0
    %242 = vmatprep.subr.mxu0 0.0
    %243 = vmatpush1.xpose.msra.mxu0 0.0
    %244 = vmatprep.subr.mxu0 0.0
    %245 = vmatpush1.xpose.msra.mxu0 0.0
    %246 = vmatprep.subr.mxu0 0.0
    %247 = vmatpush1.xpose.msra.mxu0 0.0
    %248 = vmatprep.subr.mxu0 0.0
    %249 = vmatpush1.xpose.msra.mxu0 0.0
    %250 = vmatprep.subr.mxu0 0.0
    %251 = vmatpush1.xpose.msra.mxu0 0.0
    %252 = vmatprep.subr.mxu0 0.0
    %253 = vmatpush1.xpose.msra.mxu0 0.0
    %254 = vmatprep.subr.mxu0 0.0
    %255 = vmatpush1.xpose.msra.mxu0 0.0
    %256 = vmatprep.subr.mxu0 0.0
    %257 = vmatpush1.xpose.msra.mxu0 0.0
    %258 = vmatprep.subr.mxu0 0.0
    %259 = vmatpush1.xpose.msra.mxu0 0.0
    %260 = vmatprep.subr.mxu0 0.0
    %261 = vmatpush1.xpose.msra.mxu0 0.0
    %262 = vmatprep.subr.mxu0 0.0
    %263 = vmatpush1.xpose.msra.mxu0 0.0
    %264 = vmatprep.subr.mxu0 0.0
    %265 = vmatpush1.xpose.msra.mxu0 0.0
    %266 = vmatprep.subr.mxu0 0.0
    %267 = vmatpush1.xpose.msra.mxu0 0.0
    %268 = vmatprep.subr.mxu0 0.0
    %269 = vmatpush1.xpose.msra.mxu0 0.0
    %270 = vmatprep.subr.mxu0 0.0
    %271 = vmatpush1.xpose.msra.mxu0 0.0
    %272 = vmatprep.subr.mxu0 0.0
    %273 = vmatpush1.xpose.msra.mxu0 0.0
    %274 = vmatprep.subr.mxu0 0.0
    %275 = vmatpush1.xpose.msra.mxu0 0.0
    %276 = vmatprep.subr.mxu0 0.0
    %277 = vmatpush1.xpose.msra.mxu0 0.0
    %278 = vmatprep.subr.mxu0 0.0
    %279 = vmatpush1.xpose.msra.mxu0 0.0
    %280 = vmatprep.subr.mxu0 0.0
    %281 = vmatpush1.xpose.msra.mxu0 0.0
    %282 = vmatprep.subr.mxu0 0.0
    %283 = vmatpush1.xpose.msra.mxu0 0.0
    %284 = vmatprep.mubr.f32.mxu0 %v70
    %285 = vmatmul.mubr.f32.gmra.mrb[0].mxu0 %v62
    %v286 = vpop.f32.mrb[0].mxu0
    %v287 = vadd.f32 %v217, %v286
    %v288 = vpop.f32.mrb[0].mxu0
    %289 = vdwg.mxu0
    %290 = vmatprep.subr.mxu0 %v71
    %291 = vmatpush1.xpose.msra.mxu0 %v69
    %292 = vmatprep.subr.mxu0 0.0
    %293 = vmatpush1.xpose.msra.mxu0 0.0
    %294 = vmatprep.subr.mxu0 0.0
    %295 = vmatpush1.xpose.msra.mxu0 0.0
    %296 = vmatprep.subr.mxu0 0.0
    %297 = vmatpush1.xpose.msra.mxu0 0.0
    %298 = vmatprep.subr.mxu0 0.0
    %299 = vmatpush1.xpose.msra.mxu0 0.0
    %300 = vmatprep.subr.mxu0 0.0
    %301 = vmatpush1.xpose.msra.mxu0 0.0
    %302 = vmatprep.subr.mxu0 0.0
    %303 = vmatpush1.xpose.msra.mxu0 0.0
    %304 = vmatprep.subr.mxu0 0.0
    %305 = vmatpush1.xpose.msra.mxu0 0.0
    %306 = vmatprep.subr.mxu0 0.0
    %307 = vmatpush1.xpose.msra.mxu0 0.0
    %308 = vmatprep.subr.mxu0 0.0
    %309 = vmatpush1.xpose.msra.mxu0 0.0
    %310 = vmatprep.subr.mxu0 0.0
    %311 = vmatpush1.xpose.msra.mxu0 0.0
    %312 = vmatprep.subr.mxu0 0.0
    %313 = vmatpush1.xpose.msra.mxu0 0.0
    %314 = vmatprep.subr.mxu0 0.0
    %315 = vmatpush1.xpose.msra.mxu0 0.0
    %316 = vmatprep.subr.mxu0 0.0
    %317 = vmatpush1.xpose.msra.mxu0 0.0
    %318 = vmatprep.subr.mxu0 0.0
    %319 = vmatpush1.xpose.msra.mxu0 0.0
    %320 = vmatprep.subr.mxu0 0.0
    %321 = vmatpush1.xpose.msra.mxu0 0.0
    %322 = vmatprep.subr.mxu0 0.0
    %323 = vmatpush1.xpose.msra.mxu0 0.0
    %324 = vmatprep.subr.mxu0 0.0
    %325 = vmatpush1.xpose.msra.mxu0 0.0
    %326 = vmatprep.subr.mxu0 0.0
    %327 = vmatpush1.xpose.msra.mxu0 0.0
    %328 = vmatprep.subr.mxu0 0.0
    %329 = vmatpush1.xpose.msra.mxu0 0.0
    %330 = vmatprep.subr.mxu0 0.0
    %331 = vmatpush1.xpose.msra.mxu0 0.0
    %332 = vmatprep.subr.mxu0 0.0
    %333 = vmatpush1.xpose.msra.mxu0 0.0
    %334 = vmatprep.subr.mxu0 0.0
    %335 = vmatpush1.xpose.msra.mxu0 0.0
    %336 = vmatprep.subr.mxu0 0.0
    %337 = vmatpush1.xpose.msra.mxu0 0.0
    %338 = vmatprep.subr.mxu0 0.0
    %339 = vmatpush1.xpose.msra.mxu0 0.0
    %340 = vmatprep.subr.mxu0 0.0
    %341 = vmatpush1.xpose.msra.mxu0 0.0
    %342 = vmatprep.subr.mxu0 0.0
    %343 = vmatpush1.xpose.msra.mxu0 0.0
    %344 = vmatprep.subr.mxu0 0.0
    %345 = vmatpush1.xpose.msra.mxu0 0.0
    %346 = vmatprep.subr.mxu0 0.0
    %347 = vmatpush1.xpose.msra.mxu0 0.0
    %348 = vmatprep.subr.mxu0 0.0
    %349 = vmatpush1.xpose.msra.mxu0 0.0
    %350 = vmatprep.subr.mxu0 0.0
    %351 = vmatpush1.xpose.msra.mxu0 0.0
    %352 = vmatprep.subr.mxu0 0.0
    %353 = vmatpush1.xpose.msra.mxu0 0.0
    %354 = vmatprep.mubr.f32.mxu0 %v71
    %355 = vmatmul.mubr.f32.gmra.mrb[0].mxu0 %v69
    %v356 = vpop.f32.mrb[0].mxu0
    %v357 = vadd.f32 %v287, %v356
    %v358 = vpop.f32.mrb[0].mxu0
    %359 = vdwg.mxu0
    %v360 = vadd.f32 %v35, %v357
    %vm361 = vcmask 9216
    %362 = vst.msk [vmem:[#allocation5] sm:$0x3] %vm361, %v360
    // Predicated region
    $region14: #{tpu_custom_call.1} parent=1 // pred_check
      _
    $region15: #{tpu_custom_call.1} parent=1 // pred_check_branch
      %364 = sbr.rel (0) target = $region17
    $region16: #{tpu_custom_call.1} parent=1 // pred_region
      %s366 = ssub.s32 32, 32
      %367 = vsyncadd [#allocation4], %s366
      %s369 = sshll.u32 [#allocation5], 4
      %s370 = int_to_ptr.vmem [resolvable:$true] %s369
      %372 = dma.vmem_to_hbm [thread:$0]  %s370, 32, %s1, [#allocation4]
    $region17: #{tpu_custom_call.1} parent=1 // pred_fallthru
      _
    // Predicated region
    $region18: #{tpu_custom_call.1} parent=1 // pred_check
      _
    $region19: #{tpu_custom_call.1} parent=1 // pred_check_branch
      %374 = sbr.rel (0) target = $region21
    $region20: #{tpu_custom_call.1} parent=1 // pred_region
      %375 = dma.done [#allocation4], 32
    $region21: #{tpu_custom_call.1} parent=1 // pred_fallthru
      _
    %376 = vsyncpa [#allocation3], 1
    %377 = vsyncpa [#allocation4], 1

</llo_original>
